<compile_context>
chip_gen: v5e
topology: v5e:2x2
jax: 0.10.0
libtpu: 0.0.40
codegen_flags: <defaults>
</compile_context>

<pallas_src>
import jax
import jax.numpy as jnp
from jax.experimental import pallas as pl
from jax.experimental.pallas import tpu as pltpu

EPS = 1e-09  # kept for parity with the reference module (unused in forward)

_LANE = 128


def _reparam_kernel(mean_ref, logstd_ref, eps_ref, z_ref):
    # Blocks: mean/logstd (1, T); eps/z (K, T). Compute in f32, cast on store.
    mean = mean_ref[...].astype(jnp.float32)
    logstd = logstd_ref[...].astype(jnp.float32)
    eps = eps_ref[...].astype(jnp.float32)
    z_std = jnp.exp(0.5 * logstd)                  # once per tile, shared by all K trials
    z_ref[...] = (mean + z_std * eps).astype(z_ref.dtype)


def _pick_tile(n, k, itemsize, target_bytes=1 << 20):
    """Largest multiple of 128 that divides n and keeps k*tile*itemsize <= ~target."""
    if n % _LANE != 0:
        return n  # full-extent (un-tiled) block is always layout-legal
    max_tile = max(_LANE, (target_bytes // max(1, k * itemsize)) // _LANE * _LANE)
    if n <= max_tile:
        return n
    tile = max_tile
    while tile > _LANE and n % tile != 0:
        tile -= _LANE
    return tile


def reparametrize_iw_pallas(z_mean, z_logstd, epss):
    """z_mean, z_logstd: latent array (any shape); epss: (K, *latent) -> zs: (K, *latent)."""
    k = epss.shape[0]
    latent_shape = z_mean.shape
    n = z_mean.size

    # Lane-dense flattening (contiguity-preserving; free).
    mean_f = z_mean.reshape(1, n)
    logstd_f = z_logstd.reshape(1, n)
    eps_f = epss.reshape(k, n)

    tile = _pick_tile(n, k, jnp.dtype(z_mean.dtype).itemsize)
    num_tiles = n // tile if (n % tile == 0) else 1
    if num_tiles == 1:
        tile = n

    zs_f = pl.pallas_call(
        _reparam_kernel,
        out_shape=jax.ShapeDtypeStruct((k, n), z_mean.dtype),
        grid_spec=pl.GridSpec(
            grid=(num_tiles,),
            in_specs=[
                pl.BlockSpec((1, tile), lambda i: (0, i)),   # z_mean
                pl.BlockSpec((1, tile), lambda i: (0, i)),   # z_logstd
                pl.BlockSpec((k, tile), lambda i: (0, i)),   # eps for all K trials
            ],
            out_specs=pl.BlockSpec((k, tile), lambda i: (0, i)),
        ),
        compiler_params=pltpu.CompilerParams(
            dimension_semantics=("parallel",)),
    )(mean_f, logstd_f, eps_f)

    return zs_f.reshape((k,) + latent_shape)


class ReparametrizeIW:
    """JAX/Pallas equivalent of the PyTorch Reparametrize_IW module."""

    def __init__(self, k=5):
        self.k = k

    def __call__(self, z_mean, z_logstd, key):
        # Randomness drawn with jax.random (deterministic given `key`),
        # matching torch.randn_like semantics of i.i.d. standard normals.
        epss = jax.random.normal(key, (self.k,) + z_mean.shape, dtype=z_mean.dtype)
        zs = reparametrize_iw_pallas(z_mean, z_logstd, epss)
        # Return stacked (K, ...) arrays instead of Python lists of K slices
        # (per-trial host-side slicing = one extra dispatch per trial);
        # callers wanting the PyTorch list form can use `list(zs)` lazily.
        return zs, epss


if __name__ == "__main__":
    K, B, D = 5, 8, 32  # k trials, batch, latent dim

    key = jax.random.PRNGKey(0)
    k_mean, k_logstd, k_eps = jax.random.split(key, 3)

    z_mean = jax.random.normal(k_mean, (B, D), dtype=jnp.float32)
    z_logstd = 0.1 * jax.random.normal(k_logstd, (B, D), dtype=jnp.float32)

    module = ReparametrizeIW(k=K)
    zs, epss = module(z_mean, z_logstd, k_eps)
    zs = jax.block_until_ready(zs)

    # Reference check in plain JAX.
    ref = z_mean[None] + jnp.exp(0.5 * z_logstd)[None] * epss
    assert zs.shape == (K, B, D)
    assert epss.shape == (K, B, D)
    assert jnp.allclose(zs, ref, atol=1e-5, rtol=1e-5), "mismatch vs reference"

    print("KERNEL_OK")
</pallas_src>

<mosaic_0001>
module attributes {stable_mosaic.version = 11 : i64} {
  func.func @_reparam_kernel(%arg0: i32, %arg1: memref<1x256xf32, #tpu.memory_space<vmem>>, %arg2: memref<1x256xf32, #tpu.memory_space<vmem>>, %arg3: memref<5x256xf32, #tpu.memory_space<vmem>>, %arg4: memref<5x256xf32, #tpu.memory_space<vmem>>) attributes {dimension_semantics = [#tpu.dimension_semantics<parallel>], iteration_bounds = array<i64: 1>, scalar_prefetch = 0 : i64, scratch_operands = 0 : i64, tpu.core_type = #tpu.core_type<tc>, window_params = [{transform_indices = @transform_0, window_bounds = array<i64: 1, 256>}, {transform_indices = @transform_1, window_bounds = array<i64: 1, 256>}, {transform_indices = @transform_2, window_bounds = array<i64: 5, 256>}, {transform_indices = @transform_3, window_bounds = array<i64: 5, 256>}]} {
    %c0 = arith.constant 0 : index
    %c0_0 = arith.constant 0 : index
    %0 = vector.load %arg1[%c0, %c0_0] : memref<1x256xf32, #tpu.memory_space<vmem>>, vector<1x256xf32>
    %c0_1 = arith.constant 0 : index
    %c0_2 = arith.constant 0 : index
    %1 = vector.load %arg2[%c0_1, %c0_2] : memref<1x256xf32, #tpu.memory_space<vmem>>, vector<1x256xf32>
    %c0_3 = arith.constant 0 : index
    %c0_4 = arith.constant 0 : index
    %2 = vector.load %arg3[%c0_3, %c0_4] : memref<5x256xf32, #tpu.memory_space<vmem>>, vector<5x256xf32>
    %cst = arith.constant 5.000000e-01 : f32
    %3 = vector.broadcast %cst : f32 to vector<1x256xf32>
    %4 = arith.mulf %3, %1 : vector<1x256xf32>
    %5 = math.exp %4 : vector<1x256xf32>
    %6 = vector.broadcast %5 : vector<1x256xf32> to vector<5x256xf32>
    %7 = arith.mulf %6, %2 : vector<5x256xf32>
    %8 = vector.broadcast %0 : vector<1x256xf32> to vector<5x256xf32>
    %9 = arith.addf %8, %7 : vector<5x256xf32>
    %c0_5 = arith.constant 0 : index
    %c0_6 = arith.constant 0 : index
    %10 = vector.load %arg4[%c0_5, %c0_6] : memref<5x256xf32, #tpu.memory_space<vmem>>, vector<5x256xf32>
    tpu.vector_store %arg4[%c0_5, %c0_6], %9 {strides = array<i32>} : memref<5x256xf32, #tpu.memory_space<vmem>>, vector<5x256xf32>,
    return
  }
  func.func @transform_0(%arg0: i32) -> (i32, i32) {
    %c0_i32 = arith.constant 0 : i32
    %c0_i32_0 = arith.constant 0 : i32
    return %c0_i32, %arg0 : i32, i32
  }
  func.func @transform_1(%arg0: i32) -> (i32, i32) {
    %c0_i32 = arith.constant 0 : i32
    %c0_i32_0 = arith.constant 0 : i32
    return %c0_i32, %arg0 : i32, i32
  }
  func.func @transform_2(%arg0: i32) -> (i32, i32) {
    %c0_i32 = arith.constant 0 : i32
    %c0_i32_0 = arith.constant 0 : i32
    return %c0_i32, %arg0 : i32, i32
  }
  func.func @transform_3(%arg0: i32) -> (i32, i32) {
    %c0_i32 = arith.constant 0 : i32
    %c0_i32_0 = arith.constant 0 : i32
    return %c0_i32, %arg0 : i32, i32
  }
}

</mosaic_0001>

<llo_original>
// kernel: tpu_custom_call.1
$region0: #{tpu_custom_call.1}
  #allocation0 [shape = 'u32[]', space=smem, size = 0x4, offset = 0x4, fixed_abs, tag = 'smem constant byte address 0x4 - core index']
  #allocation1 [shape = 'u32[72,128]{1,0:T(1,128)}', space=vmem, size = 0x9000, scoped, tag = 'internal scratch']
  %s0 = inlined_call_operand.hbm [shape: f32[1,256], index: 0, kind: input, shape index: {}]
  %s1 = inlined_call_operand.hbm [shape: f32[1,256], index: 1, kind: input, shape index: {}]
  %s2 = inlined_call_operand.hbm [shape: f32[5,256], index: 2, kind: input, shape index: {}]
  %s3 = inlined_call_operand.hbm [shape: f32[5,256], index: 3, kind: output, shape index: {}]
  %s4 = sld [smem:[#allocation0]]
  $region34: #{tpu_custom_call.1} parent=0
    _
  %s6 = ssub.s32 1, %s4
  %s7 = scalar_select 0, %s6, %s4
  $region1: #{tpu_custom_call.1} parent=0
    #allocation2 [shape = 'u8[1024]{0}', space=vmem, size = 0x400, scoped, tag = 'input window, operand 0, single buffered']
    #allocation3 [shape = 's32[1]{0}', space=sflag, size = 0x4, scoped, tag = 'scoped memory for tpu_custom_call.1']
    #allocation4 [shape = 's32[1]{0}', space=sflag, size = 0x4, scoped, tag = 'scoped memory for tpu_custom_call.1']
    #allocation5 [shape = 'u8[1024]{0}', space=vmem, size = 0x400, scoped, tag = 'input window, operand 1, single buffered']
    #allocation6 [shape = 's32[1]{0}', space=sflag, size = 0x4, scoped, tag = 'scoped memory for tpu_custom_call.1']
    #allocation7 [shape = 'u8[8192]{0}', space=vmem, size = 0x2000, scoped, tag = 'input window, operand 2, single buffered']
    #allocation8 [shape = 'u8[8192]{0}', space=vmem, size = 0x2000, scoped, tag = 'output window, operand 0, single buffered']
    %8 = vsyncpa [#allocation3], 0
    %9 = vsyncpa [#allocation6], 0
    %10 = vsyncpa [#allocation4], 0
    // Predicated region
    $region2: #{tpu_custom_call.1} parent=1 // pred_check
      _
    $region3: #{tpu_custom_call.1} parent=1 // pred_check_branch
      %12 = sbr.rel (0) target = $region5
    $region4: #{tpu_custom_call.1} parent=1 // pred_region
      %14 = vsyncadd [#allocation3], 0
      %s16 = sshll.u32 %s0, 4
      %s17 = int_to_ptr.hbm [resolvable:$true] %s16
      %s18 = sshll.u32 [#allocation2], 4
      %s19 = int_to_ptr.vmem [resolvable:$true] %s18
      %21 = dma.hbm_to_vmem [thread:$0]  %s17, 32, %s19, [#allocation3]
    $region5: #{tpu_custom_call.1} parent=1 // pred_fallthru
      _
    // Predicated region
    $region6: #{tpu_custom_call.1} parent=1 // pred_check
      _
    $region7: #{tpu_custom_call.1} parent=1 // pred_check_branch
      %23 = sbr.rel (0) target = $region9
    $region8: #{tpu_custom_call.1} parent=1 // pred_region
      %25 = vsyncadd [#allocation6], 0
      %s27 = sshll.u32 %s1, 4
      %s28 = int_to_ptr.hbm [resolvable:$true] %s27
      %s29 = sshll.u32 [#allocation5], 4
      %s30 = int_to_ptr.vmem [resolvable:$true] %s29
      %32 = dma.hbm_to_vmem [thread:$0]  %s28, 32, %s30, [#allocation6]
    $region9: #{tpu_custom_call.1} parent=1 // pred_fallthru
      _
    // Predicated region
    $region10: #{tpu_custom_call.1} parent=1 // pred_check
      _
    $region11: #{tpu_custom_call.1} parent=1 // pred_check_branch
      %34 = sbr.rel (0) target = $region13
    $region12: #{tpu_custom_call.1} parent=1 // pred_region
      %36 = vsyncadd [#allocation6], 0
      %s38 = sshll.u32 %s2, 4
      %s39 = int_to_ptr.hbm [resolvable:$true] %s38
      %s40 = sshll.u32 [#allocation7], 4
      %s41 = int_to_ptr.vmem [resolvable:$true] %s40
      %43 = dma.hbm_to_vmem [thread:$0]  %s39, 256, %s41, [#allocation6]
    $region13: #{tpu_custom_call.1} parent=1 // pred_fallthru
      _
    // Predicated region
    $region14: #{tpu_custom_call.1} parent=1 // pred_check
      _
    $region15: #{tpu_custom_call.1} parent=1 // pred_check_branch
      %45 = sbr.rel (0) target = $region17
    $region16: #{tpu_custom_call.1} parent=1 // pred_region
      %47 = dma.done [#allocation3], 32
    $region17: #{tpu_custom_call.1} parent=1 // pred_fallthru
      _
    // Predicated region
    $region18: #{tpu_custom_call.1} parent=1 // pred_check
      _
    $region19: #{tpu_custom_call.1} parent=1 // pred_check_branch
      %49 = sbr.rel (0) target = $region21
    $region20: #{tpu_custom_call.1} parent=1 // pred_region
      %51 = dma.done [#allocation6], 32
    $region21: #{tpu_custom_call.1} parent=1 // pred_fallthru
      _
    // Predicated region
    $region22: #{tpu_custom_call.1} parent=1 // pred_check
      _
    $region23: #{tpu_custom_call.1} parent=1 // pred_check_branch
      %53 = sbr.rel (0) target = $region25
    $region24: #{tpu_custom_call.1} parent=1 // pred_region
      %55 = dma.done [#allocation6], 256
    $region25: #{tpu_custom_call.1} parent=1 // pred_fallthru
      _
    %v56 = vld [vmem:[#allocation2] sm:$0x3]
    %v57 = vld [vmem:[#allocation5] sm:$0x3]
    %v58 = vld [vmem:[#allocation7] sm:$0x1f]
    %v59 = vld [vmem:[#allocation7 + $0x8] sm:$0x1f]
    %v60 = vmul.f32 %v57, 0.5
    %v61 = vmul.f32 %v60, 1.442695
    %v62 = vpow.pop %v61
    %v64 = vperm.slane %v62, 0
    %v65 = vperm.slane %v62, 1
    %v68 = vmul.f32 %v64, %v58
    %v69 = vmul.f32 %v65, %v59
    %v71 = vperm.slane %v56, 0
    %v72 = vperm.slane %v56, 1
    %v75 = vadd.f32 %v71, %v68
    %v76 = vadd.f32 %v72, %v69
    %77 = vst [vmem:[#allocation8] sm:$0x1f] %v75
    %78 = vst [vmem:[#allocation8 + $0x8] sm:$0x1f] %v76
    // Predicated region
    $region26: #{tpu_custom_call.1} parent=1 // pred_check
      _
    $region27: #{tpu_custom_call.1} parent=1 // pred_check_branch
      %80 = sbr.rel (0) target = $region29
    $region28: #{tpu_custom_call.1} parent=1 // pred_region
      %82 = vsyncadd [#allocation4], 0
      %s84 = sshll.u32 [#allocation8], 4
      %s85 = int_to_ptr.vmem [resolvable:$true] %s84
      %s86 = sshll.u32 %s3, 4
      %s87 = int_to_ptr.hbm [resolvable:$true] %s86
      %89 = dma.vmem_to_hbm [thread:$0]  %s85, 256, %s87, [#allocation4]
    $region29: #{tpu_custom_call.1} parent=1 // pred_fallthru
      _
    // Predicated region
    $region30: #{tpu_custom_call.1} parent=1 // pred_check
      _
    $region31: #{tpu_custom_call.1} parent=1 // pred_check_branch
      %91 = sbr.rel (0) target = $region33
    $region32: #{tpu_custom_call.1} parent=1 // pred_region
      %93 = dma.done [#allocation4], 256
    $region33: #{tpu_custom_call.1} parent=1 // pred_fallthru
      _
    %94 = vsyncpa [#allocation3], 1
    %95 = vsyncpa [#allocation6], 1
    %96 = vsyncpa [#allocation4], 1

</llo_original>
